<compile_context>
chip_gen: v6e
topology: v6e:2x2x1
jax: 0.10.0
libtpu: 0.0.40
codegen_flags: <defaults>
</compile_context>

<pallas_src>
import functools

import numpy as np
import jax
import jax.numpy as jnp
from jax.experimental import pallas as pl
from jax.experimental.pallas import tpu as pltpu


_LANE = 128
_TARGET_BLOCK_BYTES = 4 * 1024 * 1024   # ~4 MiB big-tensor block per grid step
_VMEM_LIMIT_BYTES = 48 * 1024 * 1024    # safe on v5e/v6e (128 MiB VMEM) and v7x (64 MiB / TC)


# ----------------------------- Pallas kernel --------------------------------
def _channel_attention_kernel(x_ref, w1t_ref, w2_ref, o_ref):
    # x_ref:   (NB, C, HWp) native dtype -- NB samples, channels on sublanes, spatial on lanes
    # w1t_ref: (C, Cr) f32   -- fc1 weight transposed: w1t[c, r] = W1[r, c]
    # w2_ref:  (C, Cr) f32   -- fc2 weight:            w2[c, r]  = W2[c, r]
    # o_ref:   (NB, C, HWp) native dtype
    xb = x_ref[...]                                                     # (NB, C, HWp)

    # AdaptiveMaxPool2d(1): global max over the spatial (lane) axis.  Tiny FC math in f32.
    pooled = jnp.max(xb, axis=-1, keepdims=True).astype(jnp.float32)    # (NB, C, 1)

    # fc1 (1x1 conv, no bias) + ReLU: h[n, r] = relu(sum_c W1[r, c] * pooled[n, c])
    # Broadcast over Cr lanes, reduce over C sublanes (VPU mul + XLU reduce; MXU stays free).
    h = jnp.sum(w1t_ref[...][None, :, :] * pooled, axis=1, keepdims=True)   # (NB, 1, Cr)
    h = jnp.maximum(h, 0.0)

    # fc2 (1x1 conv, no bias): att[n, c] = sum_r W2[c, r] * h[n, r]
    att = jnp.sum(w2_ref[...][None, :, :] * h, axis=2, keepdims=True)       # (NB, C, 1)

    # Sigmoid on the EUP path, then per-channel rescale of x (lane-dense store).
    att = jax.nn.sigmoid(att)                                               # (NB, C, 1)
    o_ref[...] = xb * att.astype(xb.dtype)


# ------------------------------ Module wrapper -------------------------------
def prepare_weights(fc1_weight_oi11, fc2_weight_oi11):
    """One-time weight prep (reshape / transpose / cast); keep outside the per-call hot path."""
    Cr, C = fc1_weight_oi11.shape[0], fc1_weight_oi11.shape[1]
    w1t = jnp.transpose(fc1_weight_oi11.reshape(Cr, C)).astype(jnp.float32)   # (C, Cr)
    w2 = fc2_weight_oi11.reshape(C, Cr).astype(jnp.float32)                   # (C, Cr)
    return w1t, w2


@jax.jit
def channel_attention(x_nchw, w1t, w2):
    """Forward of ChannelAttention.

    x_nchw: (N, C, H, W) — any float dtype (kept; bf16 halves HBM traffic)
    w1t:    (C, C//16) fp32 — from prepare_weights
    w2:     (C, C//16) fp32
    returns: (N, C, H, W) == x * sigmoid(fc2(relu(fc1(maxpool(x)))))
    """
    N, C, H, W = x_nchw.shape
    Cr = w1t.shape[1]
    HW = H * W
    dtype = x_nchw.dtype

    # Free trailing-dim collapse (NCHW layout kept; channels -> sublanes, spatial -> lanes).
    x = x_nchw.reshape(N, C, HW)

    # Lane-density guard: pad spatial up to a multiple of 128 so stores are unmasked full-width
    # vst.  Pad with the most-negative finite value so the max-pool ignores the padding.
    HWp = ((HW + _LANE - 1) // _LANE) * _LANE
    if HWp != HW:
        pad_val = (jnp.finfo(dtype).min if jnp.issubdtype(dtype, jnp.floating)
                   else jnp.iinfo(dtype).min)
        x = jnp.pad(x, ((0, 0), (0, 0), (0, HWp - HW)), constant_values=pad_val)

    # Batch NB samples per grid step so each block is a multi-MiB slab (amortizes per-step
    # pipeline overhead), capped so double-buffered in+out stays well under VMEM on all chips.
    per_sample_bytes = C * HWp * jnp.dtype(dtype).itemsize
    NB = max(1, min(N, _TARGET_BLOCK_BYTES // max(per_sample_bytes, 1)))
    n_blocks = (N + NB - 1) // NB
    Np = n_blocks * NB
    if Np != N:
        x = jnp.pad(x, ((0, Np - N), (0, 0), (0, 0)))

    # Advisory cost: this op is HBM-bandwidth bound (read x once, write once).
    itemsize = jnp.dtype(dtype).itemsize
    cost = pl.CostEstimate(
        flops=2 * N * C * (HW + 2 * Cr),
        transcendentals=N * C,
        bytes_accessed=2 * N * C * HW * itemsize,
    )

    out = pl.pallas_call(
        _channel_attention_kernel,
        out_shape=jax.ShapeDtypeStruct((Np, C, HWp), dtype),
        grid_spec=pltpu.PrefetchScalarGridSpec(
            num_scalar_prefetch=0,
            grid=(n_blocks,),
            in_specs=[
                pl.BlockSpec((NB, C, HWp), lambda n: (n, 0, 0)),   # NB samples per step
                pl.BlockSpec((C, Cr), lambda n: (0, 0)),           # tiny weights, resident
                pl.BlockSpec((C, Cr), lambda n: (0, 0)),
            ],
            out_specs=pl.BlockSpec((NB, C, HWp), lambda n: (n, 0, 0)),
        ),
        compiler_params=pltpu.CompilerParams(
            # On v7x, pltpu.CORE_PARALLEL on this axis shards the batch blocks across the 2 TCs.
            dimension_semantics=("parallel",),
            vmem_limit_bytes=_VMEM_LIMIT_BYTES,
        ),
        cost_estimate=cost,
    )(x, w1t, w2)

    return out[:N, :, :HW].reshape(N, C, H, W)


# --------------------------------- Reference ----------------------------------
def reference(x_nchw, fc1_weight_oi11, fc2_weight_oi11):
    N, C, H, W = x_nchw.shape
    Cr = fc1_weight_oi11.shape[0]
    x = x_nchw.astype(jnp.float32)
    w1 = fc1_weight_oi11.reshape(Cr, C).astype(jnp.float32)
    w2 = fc2_weight_oi11.reshape(C, Cr).astype(jnp.float32)

    pooled = jnp.max(x, axis=(2, 3))                 # (N, C)
    h = jnp.maximum(pooled @ w1.T, 0.0)              # (N, Cr)
    att = jax.nn.sigmoid(h @ w2.T)                   # (N, C)
    return x * att[:, :, None, None]


# ----------------------------------- Main --------------------------------------
if __name__ == "__main__":
    key = jax.random.PRNGKey(0)
    k1, k2, k3 = jax.random.split(key, 3)

    # ChannelAttention hard-codes in_planes // 16, so channels must be >= 16.
    # Use N=2, C=32, H=W=16  ->  Cr = 2.
    N, C, H, W = 2, 32, 16, 16
    Cr = C // 16

    x = jax.random.normal(k1, (N, C, H, W), dtype=jnp.float32)
    fc1_w = jax.random.normal(k2, (Cr, C, 1, 1), dtype=jnp.float32) * 0.1
    fc2_w = jax.random.normal(k3, (C, Cr, 1, 1), dtype=jnp.float32) * 0.1

    w1t, w2 = prepare_weights(fc1_w, fc2_w)
    out = channel_attention(x, w1t, w2)
    out = jax.block_until_ready(out)

    ref = reference(x, fc1_w, fc2_w)
    ref = jax.block_until_ready(ref)

    assert out.shape == (N, C, H, W), out.shape
    np.testing.assert_allclose(np.asarray(out), np.asarray(ref), rtol=1e-5, atol=1e-5)

    print("KERNEL_OK")
</pallas_src>

<mosaic_0001>
module attributes {stable_mosaic.version = 11 : i64} {
  func.func @_channel_attention_kernel(%arg0: i32, %arg1: memref<2x32x256xf32, #tpu.memory_space<vmem>>, %arg2: memref<32x2xf32, #tpu.memory_space<vmem>>, %arg3: memref<32x2xf32, #tpu.memory_space<vmem>>, %arg4: memref<2x32x256xf32, #tpu.memory_space<vmem>>) attributes {dimension_semantics = [#tpu.dimension_semantics<parallel>], iteration_bounds = array<i64: 1>, scalar_prefetch = 0 : i64, scratch_operands = 0 : i64, tpu.core_type = #tpu.core_type<tc>, window_params = [{transform_indices = @transform_0, window_bounds = array<i64: 2, 32, 256>}, {pipeline_mode = #tpu.pipeline_mode<synchronous>, transform_indices = @transform_1, window_bounds = array<i64: 32, 2>}, {pipeline_mode = #tpu.pipeline_mode<synchronous>, transform_indices = @transform_2, window_bounds = array<i64: 32, 2>}, {transform_indices = @transform_3, window_bounds = array<i64: 2, 32, 256>}]} {
    %c0 = arith.constant 0 : index
    %c0_0 = arith.constant 0 : index
    %c0_1 = arith.constant 0 : index
    %0 = vector.load %arg1[%c0, %c0_0, %c0_1] : memref<2x32x256xf32, #tpu.memory_space<vmem>>, vector<2x32x256xf32>
    %cst = arith.constant dense<0xFF800000> : vector<2x32xf32>
    %1 = vector.multi_reduction <maximumf>, %0, %cst [2] : vector<2x32x256xf32> to vector<2x32xf32>
    %2 = vector.shape_cast %1 : vector<2x32xf32> to vector<2x32x1xf32>
    %c0_2 = arith.constant 0 : index
    %c0_3 = arith.constant 0 : index
    %3 = vector.load %arg2[%c0_2, %c0_3] : memref<32x2xf32, #tpu.memory_space<vmem>>, vector<32x2xf32>
    %4 = vector.shape_cast %3 : vector<32x2xf32> to vector<1x32x2xf32>
    %5 = vector.broadcast %4 : vector<1x32x2xf32> to vector<2x32x2xf32>
    %6 = vector.broadcast %2 : vector<2x32x1xf32> to vector<2x32x2xf32>
    %7 = arith.mulf %5, %6 : vector<2x32x2xf32>
    %cst_4 = arith.constant dense<0.000000e+00> : vector<2x2xf32>
    %8 = vector.multi_reduction <add>, %7, %cst_4 [1] : vector<2x32x2xf32> to vector<2x2xf32>
    %9 = vector.shape_cast %8 : vector<2x2xf32> to vector<2x1x2xf32>
    %cst_5 = arith.constant 0.000000e+00 : f32
    %10 = vector.broadcast %cst_5 : f32 to vector<2x1x2xf32>
    %11 = arith.maximumf %9, %10 : vector<2x1x2xf32>
    %c0_6 = arith.constant 0 : index
    %c0_7 = arith.constant 0 : index
    %12 = vector.load %arg3[%c0_6, %c0_7] : memref<32x2xf32, #tpu.memory_space<vmem>>, vector<32x2xf32>
    %13 = vector.shape_cast %12 : vector<32x2xf32> to vector<1x32x2xf32>
    %14 = vector.broadcast %13 : vector<1x32x2xf32> to vector<2x32x2xf32>
    %15 = vector.broadcast %11 : vector<2x1x2xf32> to vector<2x32x2xf32>
    %16 = arith.mulf %14, %15 : vector<2x32x2xf32>
    %cst_8 = arith.constant dense<0.000000e+00> : vector<2x32xf32>
    %17 = vector.multi_reduction <add>, %16, %cst_8 [2] : vector<2x32x2xf32> to vector<2x32xf32>
    %18 = vector.shape_cast %17 : vector<2x32xf32> to vector<2x32x1xf32>
    %19 = arith.negf %18 : vector<2x32x1xf32>
    %20 = math.exp %19 : vector<2x32x1xf32>
    %cst_9 = arith.constant 1.000000e+00 : f32
    %21 = vector.broadcast %cst_9 : f32 to vector<2x32x1xf32>
    %22 = arith.addf %21, %20 : vector<2x32x1xf32>
    %23 = arith.divf %21, %22 : vector<2x32x1xf32>
    %24 = vector.broadcast %23 : vector<2x32x1xf32> to vector<2x32x256xf32>
    %25 = arith.mulf %0, %24 : vector<2x32x256xf32>
    %c0_10 = arith.constant 0 : index
    %c0_11 = arith.constant 0 : index
    %c0_12 = arith.constant 0 : index
    %26 = vector.load %arg4[%c0_10, %c0_11, %c0_12] : memref<2x32x256xf32, #tpu.memory_space<vmem>>, vector<2x32x256xf32>
    tpu.vector_store %arg4[%c0_10, %c0_11, %c0_12], %25 {strides = array<i32>} : memref<2x32x256xf32, #tpu.memory_space<vmem>>, vector<2x32x256xf32>,
    return
  }
  func.func @transform_0(%arg0: i32) -> (i32, i32, i32) {
    %c0_i32 = arith.constant 0 : i32
    %c0_i32_0 = arith.constant 0 : i32
    %c0_i32_1 = arith.constant 0 : i32
    return %arg0, %c0_i32, %c0_i32_0 : i32, i32, i32
  }
  func.func @transform_1(%arg0: i32) -> (i32, i32) {
    %c0_i32 = arith.constant 0 : i32
    %c0_i32_0 = arith.constant 0 : i32
    %c0_i32_1 = arith.constant 0 : i32
    return %c0_i32, %c0_i32_0 : i32, i32
  }
  func.func @transform_2(%arg0: i32) -> (i32, i32) {
    %c0_i32 = arith.constant 0 : i32
    %c0_i32_0 = arith.constant 0 : i32
    %c0_i32_1 = arith.constant 0 : i32
    return %c0_i32, %c0_i32_0 : i32, i32
  }
  func.func @transform_3(%arg0: i32) -> (i32, i32, i32) {
    %c0_i32 = arith.constant 0 : i32
    %c0_i32_0 = arith.constant 0 : i32
    %c0_i32_1 = arith.constant 0 : i32
    return %arg0, %c0_i32, %c0_i32_0 : i32, i32, i32
  }
}

</mosaic_0001>

<llo_original>
// kernel: channel_attention.1
$region0: #{channel_attention.1}
  #allocation0 [shape = 'u32[]', space=smem, size = 0x4, offset = 0x4, fixed_abs, tag = 'smem constant byte address 0x4 - core index']
  #allocation1 [shape = 'u32[144,128]{1,0:T(1,128)}', space=vmem, size = 0x12000, scoped, tag = 'internal scratch']
  %s0 = inlined_call_operand.vmem [shape: f32[2,32,256], index: 0, kind: input, shape index: {}]
  %s1 = inlined_call_operand.vmem [shape: f32[32,2], index: 1, kind: input, shape index: {}]
  %s2 = inlined_call_operand.vmem [shape: f32[32,2], index: 2, kind: input, shape index: {}]
  %s3 = inlined_call_operand.vmem [shape: f32[2,32,256], index: 3, kind: output, shape index: {}]
  %s4 = sld [smem:[#allocation0]]
  $region22: #{channel_attention.1} parent=0
    _
  %s6 = ssub.s32 1, %s4
  %s7 = scalar_select 0, %s6, %s4
  // Predicated region
  $region2: #{channel_attention.1} parent=0 // pred_check
    _
  $region3: #{channel_attention.1} parent=0 // pred_check_branch
    %9 = sbr.rel (0) target = $region5
  $region4: #{channel_attention.1} parent=0 // pred_region
    _
  $region5: #{channel_attention.1} parent=0 // pred_fallthru
    _
  // Predicated region
  $region6: #{channel_attention.1} parent=0 // pred_check
    _
  $region7: #{channel_attention.1} parent=0 // pred_check_branch
    %11 = sbr.rel (0) target = $region9
  $region8: #{channel_attention.1} parent=0 // pred_region
    _
  $region9: #{channel_attention.1} parent=0 // pred_fallthru
    _
  // Predicated region
  $region10: #{channel_attention.1} parent=0 // pred_check
    _
  $region11: #{channel_attention.1} parent=0 // pred_check_branch
    %13 = sbr.rel (0) target = $region13
  $region12: #{channel_attention.1} parent=0 // pred_region
    _
  $region13: #{channel_attention.1} parent=0 // pred_fallthru
    _
  %v14 = vld [vmem:[%s0] sm:$0xff]
  %v15 = vld [vmem:[%s0 + $0x8] sm:$0xff]
  %v16 = vld [vmem:[%s0 + $0x10] sm:$0xff]
  %v17 = vld [vmem:[%s0 + $0x18] sm:$0xff]
  %v18 = vld [vmem:[%s0 + $0x20] sm:$0xff]
  %v19 = vld [vmem:[%s0 + $0x28] sm:$0xff]
  %v20 = vld [vmem:[%s0 + $0x30] sm:$0xff]
  %v21 = vld [vmem:[%s0 + $0x38] sm:$0xff]
  %v22 = vld [vmem:[%s0 + $0x40] sm:$0xff]
  %v23 = vld [vmem:[%s0 + $0x48] sm:$0xff]
  %v24 = vld [vmem:[%s0 + $0x50] sm:$0xff]
  %v25 = vld [vmem:[%s0 + $0x58] sm:$0xff]
  %v26 = vld [vmem:[%s0 + $0x60] sm:$0xff]
  %v27 = vld [vmem:[%s0 + $0x68] sm:$0xff]
  %v28 = vld [vmem:[%s0 + $0x70] sm:$0xff]
  %v29 = vld [vmem:[%s0 + $0x78] sm:$0xff]
  %v30 = vmax.f32 %v14, %v15
  %31 = vmax.xlane.f32.xlu0 %v30
  %v32 = vpop.xlane.xlu0 %31
  %v33 = vmax.f32 %v16, %v17
  %34 = vmax.xlane.f32.xlu0 %v33
  %v35 = vpop.xlane.xlu0 %34
  %v36 = vmax.f32 %v18, %v19
  %37 = vmax.xlane.f32.xlu0 %v36
  %v38 = vpop.xlane.xlu0 %37
  %v39 = vmax.f32 %v20, %v21
  %40 = vmax.xlane.f32.xlu0 %v39
  %v41 = vpop.xlane.xlu0 %40
  %v42 = vmax.f32 %v22, %v23
  %43 = vmax.xlane.f32.xlu0 %v42
  %v44 = vpop.xlane.xlu0 %43
  %v45 = vmax.f32 %v24, %v25
  %46 = vmax.xlane.f32.xlu0 %v45
  %v47 = vpop.xlane.xlu0 %46
  %v48 = vmax.f32 %v26, %v27
  %49 = vmax.xlane.f32.xlu0 %v48
  %v50 = vpop.xlane.xlu0 %49
  %v51 = vmax.f32 %v28, %v29
  %52 = vmax.xlane.f32.xlu0 %v51
  %v53 = vpop.xlane.xlu0 %52
  %v54 = vld [vmem:[%s1] sm:$0xff]
  %v55 = vld [vmem:[%s1 + $0x8] sm:$0xff]
  %v56 = vld [vmem:[%s1 + $0x10] sm:$0xff]
  %v57 = vld [vmem:[%s1 + $0x18] sm:$0xff]
  %v58 = vmul.f32 %v54, %v32
  %v59 = vmul.f32 %v55, %v35
  %v60 = vmul.f32 %v56, %v38
  %v61 = vmul.f32 %v57, %v41
  %v62 = vmul.f32 %v54, %v44
  %v63 = vmul.f32 %v55, %v47
  %v64 = vmul.f32 %v56, %v50
  %v65 = vmul.f32 %v57, %v53
  %vm66 = vcmask 15360
  %v67 = vsel %vm66, %v58, 0.0
  %v68 = vsel %vm66, %v59, 0.0
  %v69 = vadd.f32 %v67, %v68
  %v70 = vsel %vm66, %v60, 0.0
  %v71 = vadd.f32 %v69, %v70
  %v72 = vsel %vm66, %v61, 0.0
  %v73 = vadd.f32 %v71, %v72
  %v74 = vrot.slane %v73, 4
  %v75 = vadd.f32 %v73, %v74
  %v76 = vrot.slane %v75, 2
  %v77 = vadd.f32 %v75, %v76
  %v78 = vrot.slane %v77, 1
  %v79 = vadd.f32 %v77, %v78
  %v80 = vsel %vm66, %v62, 0.0
  %v81 = vsel %vm66, %v63, 0.0
  %v82 = vadd.f32 %v80, %v81
  %v83 = vsel %vm66, %v64, 0.0
  %v84 = vadd.f32 %v82, %v83
  %v85 = vsel %vm66, %v65, 0.0
  %v86 = vadd.f32 %v84, %v85
  %v87 = vrot.slane %v86, 4
  %v88 = vadd.f32 %v86, %v87
  %v89 = vrot.slane %v88, 2
  %v90 = vadd.f32 %v88, %v89
  %v91 = vrot.slane %v90, 1
  %v92 = vadd.f32 %v90, %v91
  %v93 = vmax.f32 %v79, 0.0
  %v94 = vmax.f32 %v92, 0.0
  %v95 = vld [vmem:[%s2] sm:$0xff]
  %v96 = vld [vmem:[%s2 + $0x8] sm:$0xff]
  %v97 = vld [vmem:[%s2 + $0x10] sm:$0xff]
  %v98 = vld [vmem:[%s2 + $0x18] sm:$0xff]
  %v99 = vmul.f32 %v95, %v93
  %v100 = vmul.f32 %v96, %v93
  %v101 = vmul.f32 %v97, %v93
  %v102 = vmul.f32 %v98, %v93
  %v103 = vmul.f32 %v95, %v94
  %v104 = vmul.f32 %v96, %v94
  %v105 = vmul.f32 %v97, %v94
  %v106 = vmul.f32 %v98, %v94
  %v107 = vsel %vm66, %v99, 0.0
  %108 = vadd.xlane.f32.xlu0 %v107
  %v109 = vpop.xlane.xlu0 %108
  %v110 = vsel %vm66, %v100, 0.0
  %111 = vadd.xlane.f32.xlu0 %v110
  %v112 = vpop.xlane.xlu0 %111
  %v113 = vsel %vm66, %v101, 0.0
  %114 = vadd.xlane.f32.xlu0 %v113
  %v115 = vpop.xlane.xlu0 %114
  %v116 = vsel %vm66, %v102, 0.0
  %117 = vadd.xlane.f32.xlu0 %v116
  %v118 = vpop.xlane.xlu0 %117
  %v119 = vsel %vm66, %v103, 0.0
  %120 = vadd.xlane.f32.xlu0 %v119
  %v121 = vpop.xlane.xlu0 %120
  %v122 = vsel %vm66, %v104, 0.0
  %123 = vadd.xlane.f32.xlu0 %v122
  %v124 = vpop.xlane.xlu0 %123
  %v125 = vsel %vm66, %v105, 0.0
  %126 = vadd.xlane.f32.xlu0 %v125
  %v127 = vpop.xlane.xlu0 %126
  %v128 = vsel %vm66, %v106, 0.0
  %129 = vadd.xlane.f32.xlu0 %v128
  %v130 = vpop.xlane.xlu0 %129
  %v131 = vxor.u32 %v109, 2147483648
  %v132 = vxor.u32 %v112, 2147483648
  %v133 = vxor.u32 %v115, 2147483648
  %v134 = vxor.u32 %v118, 2147483648
  %v135 = vxor.u32 %v121, 2147483648
  %v136 = vxor.u32 %v124, 2147483648
  %v137 = vxor.u32 %v127, 2147483648
  %v138 = vxor.u32 %v130, 2147483648
  %v139 = vmul.f32 %v131, 1.442695
  %v140 = vpow.pop %v139
  %v141 = vmul.f32 %v132, 1.442695
  %v142 = vpow.pop %v141
  %v143 = vmul.f32 %v133, 1.442695
  %v144 = vpow.pop %v143
  %v145 = vmul.f32 %v134, 1.442695
  %v146 = vpow.pop %v145
  %v147 = vmul.f32 %v135, 1.442695
  %v148 = vpow.pop %v147
  %v149 = vmul.f32 %v136, 1.442695
  %v150 = vpow.pop %v149
  %v151 = vmul.f32 %v137, 1.442695
  %v152 = vpow.pop %v151
  %v153 = vmul.f32 %v138, 1.442695
  %v154 = vpow.pop %v153
  %v155 = vadd.f32 %v140, 1.0
  %v156 = vadd.f32 %v142, 1.0
  %v157 = vadd.f32 %v144, 1.0
  %v158 = vadd.f32 %v146, 1.0
  %v159 = vadd.f32 %v148, 1.0
  %v160 = vadd.f32 %v150, 1.0
  %v161 = vadd.f32 %v152, 1.0
  %v162 = vadd.f32 %v154, 1.0
  %v163 = vrcp.pop %v155
  %v164 = vmul.f32 1.0, %v163
  %v165 = vrcp.pop %v156
  %v166 = vmul.f32 1.0, %v165
  %v167 = vrcp.pop %v157
  %v168 = vmul.f32 1.0, %v167
  %v169 = vrcp.pop %v158
  %v170 = vmul.f32 1.0, %v169
  %v171 = vrcp.pop %v159
  %v172 = vmul.f32 1.0, %v171
  %v173 = vrcp.pop %v160
  %v174 = vmul.f32 1.0, %v173
  %v175 = vrcp.pop %v161
  %v176 = vmul.f32 1.0, %v175
  %v177 = vrcp.pop %v162
  %v178 = vmul.f32 1.0, %v177
  %v179 = vmul.f32 %v14, %v164
  %v180 = vmul.f32 %v15, %v164
  %v181 = vmul.f32 %v16, %v166
  %v182 = vmul.f32 %v17, %v166
  %v183 = vmul.f32 %v18, %v168
  %v184 = vmul.f32 %v19, %v168
  %v185 = vmul.f32 %v20, %v170
  %v186 = vmul.f32 %v21, %v170
  %v187 = vmul.f32 %v22, %v172
  %v188 = vmul.f32 %v23, %v172
  %v189 = vmul.f32 %v24, %v174
  %v190 = vmul.f32 %v25, %v174
  %v191 = vmul.f32 %v26, %v176
  %v192 = vmul.f32 %v27, %v176
  %v193 = vmul.f32 %v28, %v178
  %v194 = vmul.f32 %v29, %v178
  %195 = vst [vmem:[%s3] sm:$0xff] %v179
  %196 = vst [vmem:[%s3 + $0x8] sm:$0xff] %v180
  %197 = vst [vmem:[%s3 + $0x10] sm:$0xff] %v181
  %198 = vst [vmem:[%s3 + $0x18] sm:$0xff] %v182
  %199 = vst [vmem:[%s3 + $0x20] sm:$0xff] %v183
  %200 = vst [vmem:[%s3 + $0x28] sm:$0xff] %v184
  %201 = vst [vmem:[%s3 + $0x30] sm:$0xff] %v185
  %202 = vst [vmem:[%s3 + $0x38] sm:$0xff] %v186
  %203 = vst [vmem:[%s3 + $0x40] sm:$0xff] %v187
  %204 = vst [vmem:[%s3 + $0x48] sm:$0xff] %v188
  %205 = vst [vmem:[%s3 + $0x50] sm:$0xff] %v189
  %206 = vst [vmem:[%s3 + $0x58] sm:$0xff] %v190
  %207 = vst [vmem:[%s3 + $0x60] sm:$0xff] %v191
  %208 = vst [vmem:[%s3 + $0x68] sm:$0xff] %v192
  %209 = vst [vmem:[%s3 + $0x70] sm:$0xff] %v193
  %210 = vst [vmem:[%s3 + $0x78] sm:$0xff] %v194
  // Predicated region
  $region14: #{channel_attention.1} parent=0 // pred_check
    _
  $region15: #{channel_attention.1} parent=0 // pred_check_branch
    %212 = sbr.rel (0) target = $region17
  $region16: #{channel_attention.1} parent=0 // pred_region
    _
  $region17: #{channel_attention.1} parent=0 // pred_fallthru
    _
  // Predicated region
  $region18: #{channel_attention.1} parent=0 // pred_check
    _
  $region19: #{channel_attention.1} parent=0 // pred_check_branch
    %214 = sbr.rel (0) target = $region21
  $region20: #{channel_attention.1} parent=0 // pred_region
    _
  $region21: #{channel_attention.1} parent=0 // pred_fallthru
    _

</llo_original>
